<compile_context>
chip_gen: v7x
topology: tpu7x:2x2x1
jax: 0.10.0
libtpu: 0.0.40
codegen_flags: <defaults>
</compile_context>

<pallas_src>
import math

import jax
import jax.numpy as jnp
from jax.experimental import pallas as pl
from jax.experimental.pallas import tpu as pltpu


def _round_up(a, b):
    return ((a + b - 1) // b) * b


def _maybe_pad(arr, pads):
    if all(lo == 0 and hi == 0 for lo, hi in pads):
        return arr
    return jnp.pad(arr, pads)


def _vmem_capacity_bytes():
    try:
        return int(pltpu.get_tpu_info().vmem_capacity_bytes)
    except Exception:
        return 64 * 1024 * 1024  # conservative fallback (v7x per-TC VMEM)


def _pick_tile(n, candidates, align, max_waste=0.15):
    """Largest `align`-aligned tile whose relative padding waste is small."""
    full = _round_up(n, align)
    cands = {c for c in candidates if c <= full}
    if full <= max(candidates):
        cands.add(full)
    for c in sorted(cands, reverse=True):
        padded = _round_up(n, c)
        if (padded - n) / n <= max_waste:
            return c
    return min(cands)


def _xw_bias_kernel(x_ref, w_ref, b_ref, o_ref):
    # XW = x @ W + bias, computed once per row tile. f32 accumulate, cast on
    # store (bf16 when streaming stage 2 in half precision).
    xw = jnp.dot(x_ref[...], w_ref[...], preferred_element_type=jnp.float32)
    o_ref[...] = (xw + b_ref[...]).astype(o_ref.dtype)


def _make_g_matmul_kernel(tk, resident_xw, separate_acc):
    """Stage-2 body: out[i, j] += G[i, k] @ XW[k, j] over the k grid axis."""

    def _body(g_ref, xw_ref, o_ref, acc_ref):
        k = pl.program_id(2)

        @pl.when(k == 0)
        def _():
            acc_ref[...] = jnp.zeros_like(acc_ref)

        if resident_xw:
            # XW is fully VMEM-resident; take this reduction slice in-kernel.
            start = pl.multiple_of(k * tk, tk)
            xw_blk = xw_ref[pl.ds(start, tk), :]
        else:
            xw_blk = xw_ref[...]

        acc_ref[...] += jnp.dot(g_ref[...], xw_blk,
                                preferred_element_type=jnp.float32)

        if separate_acc:
            @pl.when(k == pl.num_programs(2) - 1)
            def _():
                o_ref[...] = acc_ref[...].astype(o_ref.dtype)

    if separate_acc:
        def kernel(g_ref, xw_ref, o_ref, acc_ref):
            _body(g_ref, xw_ref, o_ref, acc_ref)
    else:
        # f32 output: accumulate directly into the resident output block.
        def kernel(g_ref, xw_ref, o_ref):
            _body(g_ref, xw_ref, o_ref, o_ref)

    return kernel


def hgnn_conv(x, G, weight, bias=None, *, stream_dtype=None):
    """HGNN_conv forward: G @ (x @ weight + bias).

    x:      [N, in_ft]
    G:      [N, N]
    weight: [in_ft, out_ft]
    bias:   [out_ft] or None
    stream_dtype: dtype used to stream G / XW through HBM (e.g. jnp.bfloat16).
                  Accumulation is always f32.  Pass G already in this dtype to
                  avoid an extra full-HBM cast pass in the hot path.
    """
    N, in_ft = x.shape
    out_ft = weight.shape[1]
    out_dtype = x.dtype
    if stream_dtype is None:
        stream_dtype = x.dtype
    stream_dtype = jnp.dtype(stream_dtype)
    stream_bytes = stream_dtype.itemsize
    out_bytes = jnp.dtype(out_dtype).itemsize

    # ---- per-generation VMEM budget -----------------------------------------
    vmem_cap = _vmem_capacity_bytes()
    budget = int(0.7 * vmem_cap)  # ~45 MiB on v7x (64 MiB/TC), ~90 MiB v5e/v6e

    # ---- tile selection (lane-dense, (8,128)-aligned, low padding waste) ----
    out_ft_p = _round_up(out_ft, 128)
    if out_ft_p <= 512:
        tn = out_ft_p
    else:
        tn = next(t for t in (512, 256, 128) if out_ft_p % t == 0)

    tk = _pick_tile(N, (2048, 1024, 512, 256, 128), 128)   # reduction tile
    tm = _pick_tile(N, (1024, 512, 256, 128, 64), 8)       # output-row tile
    n_pk = _round_up(N, tk)
    n_pm = _round_up(N, tm)

    # v7x dual-TC: keep at least two row tiles on the "parallel" axis.
    while n_pm // tm < 2 and tm > 256:
        tm = _round_up(tm // 2, 8)
        n_pm = _round_up(N, tm)

    separate_acc = jnp.dtype(out_dtype) != jnp.dtype(jnp.float32)

    def stage2_footprint(tm_, tk_, tn_, resident_):
        g = 2 * tm_ * tk_ * stream_bytes                     # double-buffered G
        xw = (2 * n_pk * tn_ if resident_ else 2 * tk_ * tn_) * stream_bytes
        out = 2 * tm_ * tn_ * out_bytes
        acc = tm_ * tn_ * 4 if separate_acc else 0
        return g + xw + out + acc

    # Shrink (reduction axis first, then rows) if even the streamed-XW plan
    # would exceed the budget.
    while stage2_footprint(tm, tk, tn, False) > budget and (tk > 128 or tm > 8):
        if tk > 128:
            tk = max(128, _round_up(tk // 2, 128))
            n_pk = _round_up(N, tk)
        else:
            tm = max(8, _round_up(tm // 2, 8))
            n_pm = _round_up(N, tm)

    resident_xw = stage2_footprint(tm, tk, tn, True) <= budget

    # ---- padding -------------------------------------------------------------
    if bias is None:
        bias = jnp.zeros((out_ft,), dtype=weight.dtype)

    # Padded x rows produce XW rows equal to `bias`; they are cancelled because
    # G's padded reduction columns are zero.  Keep this invariant on refactor.
    x_p = _maybe_pad(x, ((0, n_pk - N), (0, 0)))
    w_p = _maybe_pad(weight, ((0, 0), (0, out_ft_p - out_ft)))
    b_p = _maybe_pad(bias.reshape(1, out_ft), ((0, 0), (0, out_ft_p - out_ft)))

    # Only cast when the caller did not already hoist it (bf16 G across layers).
    # TODO(synk): fp8 (e4m3) G streaming with a per-tile scale for v7x.
    g = G if G.dtype == stream_dtype else G.astype(stream_dtype)
    g_p = _maybe_pad(g, ((0, n_pm - N), (0, n_pk - N)))

    # ---- stage 1: XW = x @ W + bias (computed exactly once) -----------------
    tm1 = tk  # divides n_pk by construction
    fp1 = (2 * tm1 * in_ft * x.dtype.itemsize
           + 2 * in_ft * out_ft_p * weight.dtype.itemsize
           + 2 * out_ft_p * 4
           + 2 * tm1 * out_ft_p * stream_bytes)
    xw = pl.pallas_call(
        _xw_bias_kernel,
        out_shape=jax.ShapeDtypeStruct((n_pk, out_ft_p), stream_dtype),
        grid_spec=pltpu.PrefetchScalarGridSpec(
            num_scalar_prefetch=0,
            grid=(n_pk // tm1,),
            in_specs=[
                pl.BlockSpec((tm1, in_ft), lambda i: (i, 0)),
                pl.BlockSpec((in_ft, out_ft_p), lambda i: (0, 0)),
                pl.BlockSpec((1, out_ft_p), lambda i: (0, 0)),
            ],
            out_specs=pl.BlockSpec((tm1, out_ft_p), lambda i: (i, 0)),
        ),
        compiler_params=pltpu.CompilerParams(
            dimension_semantics=("parallel",),
            vmem_limit_bytes=int(min(vmem_cap, max(fp1 + 8 * 2**20, 32 * 2**20))),
        ),
    )(x_p, w_p, b_p)

    # ---- stage 2: out = G @ XW, tiled (rows x features x reduction) ---------
    n_i, n_j, n_k = n_pm // tm, out_ft_p // tn, n_pk // tk

    if resident_xw:
        xw_spec = pl.BlockSpec((n_pk, tn), lambda i, j, k: (0, j))
    else:
        xw_spec = pl.BlockSpec((tk, tn), lambda i, j, k: (k, j))

    xw_reads = 1 if (resident_xw and n_j == 1) else n_i
    cost = pl.CostEstimate(
        flops=2 * n_pm * n_pk * out_ft_p,
        transcendentals=0,
        bytes_accessed=(stream_bytes * n_pm * n_pk
                        + stream_bytes * xw_reads * n_pk * out_ft_p
                        + out_bytes * n_pm * out_ft_p),
    )

    fp2 = stage2_footprint(tm, tk, tn, resident_xw)
    kernel = _make_g_matmul_kernel(tk, resident_xw, separate_acc)
    scratch = [pltpu.VMEM((tm, tn), jnp.float32)] if separate_acc else []

    out_p = pl.pallas_call(
        kernel,
        out_shape=jax.ShapeDtypeStruct((n_pm, out_ft_p), out_dtype),
        grid_spec=pltpu.PrefetchScalarGridSpec(
            num_scalar_prefetch=0,
            grid=(n_i, n_j, n_k),                           # reduction last
            in_specs=[
                pl.BlockSpec((tm, tk), lambda i, j, k: (i, k)),   # G tile
                xw_spec,                                          # XW
            ],
            out_specs=pl.BlockSpec((tm, tn), lambda i, j, k: (i, j)),
            scratch_shapes=scratch,
        ),
        compiler_params=pltpu.CompilerParams(
            dimension_semantics=("parallel", "parallel", "arbitrary"),
            vmem_limit_bytes=int(min(vmem_cap, max(fp2 + 8 * 2**20, 32 * 2**20))),
        ),
        cost_estimate=cost,
    )(g_p, xw)

    if n_pm == N and out_ft_p == out_ft:
        return out_p
    return out_p[:N, :out_ft]


if __name__ == "__main__":
    key = jax.random.PRNGKey(0)
    k1, k2 = jax.random.split(key)

    # ---- test 1 & 2: small module-consistent shapes --------------------------
    N, in_ft, out_ft = 64, 32, 32
    k_x, k_g, k_w, k_b = jax.random.split(k1, 4)
    # Parameter init matching reset_parameters(): uniform(-stdv, stdv),
    # stdv = 1/sqrt(out_ft).
    stdv = 1.0 / math.sqrt(out_ft)
    weight = jax.random.uniform(k_w, (in_ft, out_ft), jnp.float32, -stdv, stdv)
    bias = jax.random.uniform(k_b, (out_ft,), jnp.float32, -stdv, stdv)
    x = jax.random.normal(k_x, (N, in_ft), jnp.float32)
    G = jax.random.normal(k_g, (N, N), jnp.float32)
    ref = G @ (x @ weight + bias)

    # 1) f32 streaming path (default) — tight tolerance.
    out = jax.block_until_ready(hgnn_conv(x, G, weight, bias))
    assert out.shape == (N, out_ft)
    assert jnp.allclose(out, ref, atol=1e-4, rtol=1e-4), "f32 path mismatch"

    # 2) bf16-streamed G / XW (G cast hoisted to the caller), f32 accumulate.
    out_bf16 = jax.block_until_ready(
        hgnn_conv(x, G.astype(jnp.bfloat16), weight, bias,
                  stream_dtype=jnp.bfloat16))
    assert out_bf16.shape == (N, out_ft)
    assert jnp.allclose(out_bf16, ref, atol=5e-1, rtol=5e-2), "bf16 path mismatch"

    # 3) Non-aligned shapes exercising padding / slicing paths.
    N2, in2, out2 = 100, 48, 40
    k_x2, k_g2, k_w2, k_b2 = jax.random.split(k2, 4)
    stdv2 = 1.0 / math.sqrt(out2)
    w2 = jax.random.uniform(k_w2, (in2, out2), jnp.float32, -stdv2, stdv2)
    b2 = jax.random.uniform(k_b2, (out2,), jnp.float32, -stdv2, stdv2)
    x2 = jax.random.normal(k_x2, (N2, in2), jnp.float32)
    G2 = jax.random.normal(k_g2, (N2, N2), jnp.float32)
    out2_k = jax.block_until_ready(hgnn_conv(x2, G2, w2, b2))
    ref2 = G2 @ (x2 @ w2 + b2)
    assert out2_k.shape == (N2, out2)
    assert jnp.allclose(out2_k, ref2, atol=1e-4, rtol=1e-4), "padded path mismatch"

    print("KERNEL_OK")
</pallas_src>

<mosaic_0001>
module attributes {stable_mosaic.version = 11 : i64} {
  func.func @_xw_bias_kernel(%arg0: i32, %arg1: memref<128x32xf32, #tpu.memory_space<vmem>>, %arg2: memref<32x128xf32, #tpu.memory_space<vmem>>, %arg3: memref<1x128xf32, #tpu.memory_space<vmem>>, %arg4: memref<128x128xf32, #tpu.memory_space<vmem>>) attributes {dimension_semantics = [#tpu.dimension_semantics<parallel>], iteration_bounds = array<i64: 1>, scalar_prefetch = 0 : i64, scratch_operands = 0 : i64, tpu.core_type = #tpu.core_type<tc>, window_params = [{transform_indices = @transform_0, window_bounds = array<i64: 128, 32>}, {pipeline_mode = #tpu.pipeline_mode<synchronous>, transform_indices = @transform_1, window_bounds = array<i64: 32, 128>}, {pipeline_mode = #tpu.pipeline_mode<synchronous>, transform_indices = @transform_2, window_bounds = array<i64: 1, 128>}, {transform_indices = @transform_3, window_bounds = array<i64: 128, 128>}]} {
    %c0 = arith.constant 0 : index
    %c0_0 = arith.constant 0 : index
    %0 = vector.load %arg1[%c0, %c0_0] : memref<128x32xf32, #tpu.memory_space<vmem>>, vector<128x32xf32>
    %c0_1 = arith.constant 0 : index
    %c0_2 = arith.constant 0 : index
    %1 = vector.load %arg2[%c0_1, %c0_2] : memref<32x128xf32, #tpu.memory_space<vmem>>, vector<32x128xf32>
    %cst = arith.constant dense<0.000000e+00> : vector<128x128xf32>
    %2 = tpu.matmul %0, %1, %cst {dimension_numbers = #tpu.dot_dimension_numbers<[1], [0], [0], [1], [0, 0, 1, 1], [], []>} : vector<128x32xf32>, vector<32x128xf32>, vector<128x128xf32> -> vector<128x128xf32>
    %c0_3 = arith.constant 0 : index
    %c0_4 = arith.constant 0 : index
    %3 = vector.load %arg3[%c0_3, %c0_4] : memref<1x128xf32, #tpu.memory_space<vmem>>, vector<1x128xf32>
    %4 = vector.broadcast %3 : vector<1x128xf32> to vector<128x128xf32>
    %5 = arith.addf %2, %4 : vector<128x128xf32>
    %c0_5 = arith.constant 0 : index
    %c0_6 = arith.constant 0 : index
    %6 = vector.load %arg4[%c0_5, %c0_6] : memref<128x128xf32, #tpu.memory_space<vmem>>, vector<128x128xf32>
    tpu.vector_store %arg4[%c0_5, %c0_6], %5 {strides = array<i32>} : memref<128x128xf32, #tpu.memory_space<vmem>>, vector<128x128xf32>,
    return
  }
  func.func @transform_0(%arg0: i32) -> (i32, i32) {
    %c0_i32 = arith.constant 0 : i32
    %c0_i32_0 = arith.constant 0 : i32
    return %arg0, %c0_i32 : i32, i32
  }
  func.func @transform_1(%arg0: i32) -> (i32, i32) {
    %c0_i32 = arith.constant 0 : i32
    %c0_i32_0 = arith.constant 0 : i32
    %c0_i32_1 = arith.constant 0 : i32
    return %c0_i32, %c0_i32_0 : i32, i32
  }
  func.func @transform_2(%arg0: i32) -> (i32, i32) {
    %c0_i32 = arith.constant 0 : i32
    %c0_i32_0 = arith.constant 0 : i32
    %c0_i32_1 = arith.constant 0 : i32
    return %c0_i32, %c0_i32_0 : i32, i32
  }
  func.func @transform_3(%arg0: i32) -> (i32, i32) {
    %c0_i32 = arith.constant 0 : i32
    %c0_i32_0 = arith.constant 0 : i32
    return %arg0, %c0_i32 : i32, i32
  }
}

</mosaic_0001>

<llo_original>
// kernel: tpu_custom_call.1
$region0: #{tpu_custom_call.1}
  #allocation0 [shape = 'u32[]', space=smem, size = 0x4, offset = 0x4, fixed_abs, tag = 'smem constant byte address 0x4 - core index']
  #allocation1 [shape = 'u32[144,128]{1,0:T(1,128)}', space=vmem, size = 0x12000, scoped, tag = 'internal scratch']
  %s0 = inlined_call_operand.vmem [shape: f32[128,32], index: 0, kind: input, shape index: {}]
  %s1 = inlined_call_operand.vmem [shape: f32[32,128], index: 1, kind: input, shape index: {}]
  %s2 = inlined_call_operand.vmem [shape: f32[1,128], index: 2, kind: input, shape index: {}]
  %s3 = inlined_call_operand.hbm [shape: f32[128,128], index: 3, kind: output, shape index: {}]
  %s4 = sld [smem:[#allocation0]]
  $region22: #{tpu_custom_call.1} parent=0
    _
  %s6 = ssub.s32 1, %s4
  %s7 = scalar_select 0, %s6, %s4
  $region1: #{tpu_custom_call.1} parent=0
    #allocation2 [shape = 'u8[65536]{0}', space=vmem, size = 0x10000, scoped, tag = 'output window, operand 0, single buffered']
    #allocation3 [shape = 's32[1]{0}', space=sflag, size = 0x4, scoped, tag = 'scoped memory for tpu_custom_call.1']
    %8 = vsyncpa [#allocation3], 0
    // Predicated region
    $region2: #{tpu_custom_call.1} parent=1 // pred_check
      _
    $region3: #{tpu_custom_call.1} parent=1 // pred_check_branch
      %10 = sbr.rel (0) target = $region5
    $region4: #{tpu_custom_call.1} parent=1 // pred_region
      _
    $region5: #{tpu_custom_call.1} parent=1 // pred_fallthru
      _
    // Predicated region
    $region6: #{tpu_custom_call.1} parent=1 // pred_check
      _
    $region7: #{tpu_custom_call.1} parent=1 // pred_check_branch
      %12 = sbr.rel (0) target = $region9
    $region8: #{tpu_custom_call.1} parent=1 // pred_region
      _
    $region9: #{tpu_custom_call.1} parent=1 // pred_fallthru
      _
    // Predicated region
    $region10: #{tpu_custom_call.1} parent=1 // pred_check
      _
    $region11: #{tpu_custom_call.1} parent=1 // pred_check_branch
      %14 = sbr.rel (0) target = $region13
    $region12: #{tpu_custom_call.1} parent=1 // pred_region
      _
    $region13: #{tpu_custom_call.1} parent=1 // pred_fallthru
      _
    %v15 = vld [vmem:[%s0] sm:$0xff]
    %v16 = vld [vmem:[%s0 + $0x8] sm:$0xff]
    %v17 = vld [vmem:[%s0 + $0x10] sm:$0xff]
    %v18 = vld [vmem:[%s0 + $0x18] sm:$0xff]
    %v19 = vld [vmem:[%s0 + $0x20] sm:$0xff]
    %v20 = vld [vmem:[%s0 + $0x28] sm:$0xff]
    %v21 = vld [vmem:[%s0 + $0x30] sm:$0xff]
    %v22 = vld [vmem:[%s0 + $0x38] sm:$0xff]
    %v23 = vld [vmem:[%s0 + $0x40] sm:$0xff]
    %v24 = vld [vmem:[%s0 + $0x48] sm:$0xff]
    %v25 = vld [vmem:[%s0 + $0x50] sm:$0xff]
    %v26 = vld [vmem:[%s0 + $0x58] sm:$0xff]
    %v27 = vld [vmem:[%s0 + $0x60] sm:$0xff]
    %v28 = vld [vmem:[%s0 + $0x68] sm:$0xff]
    %v29 = vld [vmem:[%s0 + $0x70] sm:$0xff]
    %v30 = vld [vmem:[%s0 + $0x78] sm:$0xff]
    %v31 = vld [vmem:[%s1] sm:$0xff]
    %v32 = vld [vmem:[%s1 + $0x8] sm:$0xff]
    %v33 = vld [vmem:[%s1 + $0x10] sm:$0xff]
    %v34 = vld [vmem:[%s1 + $0x18] sm:$0xff]
    %v35 = vld [vmem:[%s2] sm:$0x1]
    %v37 = vlaneseq
    %v38 = vshrl.u32 %v37, 7
    %v39 = vsub.s32 0, %v38
    %v40 = vrot.slane %v35, %v39
    %vm42 = vcmask 261120
    %v44 = vsel %vm42, %v15, 0
    %v47 = vsel %vm42, %v16, 0
    %v50 = vsel %vm42, %v17, 0
    %v53 = vsel %vm42, %v18, 0
    %v56 = vsel %vm42, %v19, 0
    %v59 = vsel %vm42, %v20, 0
    %v62 = vsel %vm42, %v21, 0
    %v65 = vsel %vm42, %v22, 0
    %v68 = vsel %vm42, %v23, 0
    %v71 = vsel %vm42, %v24, 0
    %v74 = vsel %vm42, %v25, 0
    %v77 = vsel %vm42, %v26, 0
    %v80 = vsel %vm42, %v27, 0
    %v83 = vsel %vm42, %v28, 0
    %v86 = vsel %vm42, %v29, 0
    %v89 = vsel %vm42, %v30, 0
    %91 = vmatprep.subr.mxu0 0.0
    %92 = vmatpush1.msra.mxu0 %v31
    %93 = vmatprep.subr.mxu0 0.0
    %94 = vmatpush1.msra.mxu0 %v32
    %95 = vmatprep.subr.mxu0 0.0
    %96 = vmatpush1.msra.mxu0 %v33
    %97 = vmatprep.subr.mxu0 0.0
    %98 = vmatpush1.msra.mxu0 %v34
    %99 = vmatprep.subr.mxu0 0.0
    %100 = vmatpush1.msra.mxu0 0.0
    %101 = vmatprep.subr.mxu0 0.0
    %102 = vmatpush1.msra.mxu0 0.0
    %103 = vmatprep.subr.mxu0 0.0
    %104 = vmatpush1.msra.mxu0 0.0
    %105 = vmatprep.subr.mxu0 0.0
    %106 = vmatpush1.msra.mxu0 0.0
    %107 = vmatprep.subr.mxu0 0.0
    %108 = vmatpush1.msra.mxu0 0.0
    %109 = vmatprep.subr.mxu0 0.0
    %110 = vmatpush1.msra.mxu0 0.0
    %111 = vmatprep.subr.mxu0 0.0
    %112 = vmatpush1.msra.mxu0 0.0
    %113 = vmatprep.subr.mxu0 0.0
    %114 = vmatpush1.msra.mxu0 0.0
    %115 = vmatprep.subr.mxu0 0.0
    %116 = vmatpush1.msra.mxu0 0.0
    %117 = vmatprep.subr.mxu0 0.0
    %118 = vmatpush1.msra.mxu0 0.0
    %119 = vmatprep.subr.mxu0 0.0
    %120 = vmatpush1.msra.mxu0 0.0
    %121 = vmatprep.subr.mxu0 0.0
    %122 = vmatpush1.msra.mxu0 0.0
    %123 = vmatprep.subr.mxu0 0.0
    %124 = vmatpush1.msra.mxu0 0.0
    %125 = vmatprep.subr.mxu0 0.0
    %126 = vmatpush1.msra.mxu0 0.0
    %127 = vmatprep.subr.mxu0 0.0
    %128 = vmatpush1.msra.mxu0 0.0
    %129 = vmatprep.subr.mxu0 0.0
    %130 = vmatpush1.msra.mxu0 0.0
    %131 = vmatprep.subr.mxu0 0.0
    %132 = vmatpush1.msra.mxu0 0.0
    %133 = vmatprep.subr.mxu0 0.0
    %134 = vmatpush1.msra.mxu0 0.0
    %135 = vmatprep.subr.mxu0 0.0
    %136 = vmatpush1.msra.mxu0 0.0
    %137 = vmatprep.subr.mxu0 0.0
    %138 = vmatpush1.msra.mxu0 0.0
    %139 = vmatprep.subr.mxu0 0.0
    %140 = vmatpush1.msra.mxu0 0.0
    %141 = vmatprep.subr.mxu0 0.0
    %142 = vmatpush1.msra.mxu0 0.0
    %143 = vmatprep.subr.mxu0 0.0
    %144 = vmatpush1.msra.mxu0 0.0
    %145 = vmatprep.subr.mxu0 0.0
    %146 = vmatpush1.msra.mxu0 0.0
    %147 = vmatprep.subr.mxu0 0.0
    %148 = vmatpush1.msra.mxu0 0.0
    %149 = vmatprep.subr.mxu0 0.0
    %150 = vmatpush1.msra.mxu0 0.0
    %151 = vmatprep.subr.mxu0 0.0
    %152 = vmatpush1.msra.mxu0 0.0
    %153 = vmatprep.subr.mxu0 0.0
    %154 = vmatpush1.msra.mxu0 0.0
    %155 = vmatprep.mubr.f32.mxu0 0.0
    %156 = vmatmul.mubr.f32.gmra.mrb[0].mxu0 %v44
    %v157 = vpop.f32.mrb[0].mxu0
    %v158 = vadd.f32 %v40, %v157
    %v159 = vpop.f32.mrb[0].mxu0
    %160 = vmatprep.mubr.f32.mxu0 0.0
    %161 = vmatmul.mubr.f32.gmra.mrb[0].mxu0 %v47
    %v162 = vpop.f32.mrb[0].mxu0
    %v163 = vadd.f32 %v40, %v162
    %v164 = vpop.f32.mrb[0].mxu0
    %165 = vmatprep.mubr.f32.mxu0 0.0
    %166 = vmatmul.mubr.f32.gmra.mrb[0].mxu0 %v50
    %v167 = vpop.f32.mrb[0].mxu0
    %v168 = vadd.f32 %v40, %v167
    %v169 = vpop.f32.mrb[0].mxu0
    %170 = vmatprep.mubr.f32.mxu0 0.0
    %171 = vmatmul.mubr.f32.gmra.mrb[0].mxu0 %v53
    %v172 = vpop.f32.mrb[0].mxu0
    %v173 = vadd.f32 %v40, %v172
    %v174 = vpop.f32.mrb[0].mxu0
    %175 = vmatprep.mubr.f32.mxu0 0.0
    %176 = vmatmul.mubr.f32.gmra.mrb[0].mxu0 %v56
    %v177 = vpop.f32.mrb[0].mxu0
    %v178 = vadd.f32 %v40, %v177
    %v179 = vpop.f32.mrb[0].mxu0
    %180 = vmatprep.mubr.f32.mxu0 0.0
    %181 = vmatmul.mubr.f32.gmra.mrb[0].mxu0 %v59
    %v182 = vpop.f32.mrb[0].mxu0
    %v183 = vadd.f32 %v40, %v182
    %v184 = vpop.f32.mrb[0].mxu0
    %185 = vmatprep.mubr.f32.mxu0 0.0
    %186 = vmatmul.mubr.f32.gmra.mrb[0].mxu0 %v62
    %v187 = vpop.f32.mrb[0].mxu0
    %v188 = vadd.f32 %v40, %v187
    %v189 = vpop.f32.mrb[0].mxu0
    %190 = vmatprep.mubr.f32.mxu0 0.0
    %191 = vmatmul.mubr.f32.gmra.mrb[0].mxu0 %v65
    %v192 = vpop.f32.mrb[0].mxu0
    %v193 = vadd.f32 %v40, %v192
    %v194 = vpop.f32.mrb[0].mxu0
    %195 = vmatprep.mubr.f32.mxu0 0.0
    %196 = vmatmul.mubr.f32.gmra.mrb[0].mxu0 %v68
    %v197 = vpop.f32.mrb[0].mxu0
    %v198 = vadd.f32 %v40, %v197
    %v199 = vpop.f32.mrb[0].mxu0
    %200 = vmatprep.mubr.f32.mxu0 0.0
    %201 = vmatmul.mubr.f32.gmra.mrb[0].mxu0 %v71
    %v202 = vpop.f32.mrb[0].mxu0
    %v203 = vadd.f32 %v40, %v202
    %v204 = vpop.f32.mrb[0].mxu0
    %205 = vmatprep.mubr.f32.mxu0 0.0
    %206 = vmatmul.mubr.f32.gmra.mrb[0].mxu0 %v74
    %v207 = vpop.f32.mrb[0].mxu0
    %v208 = vadd.f32 %v40, %v207
    %v209 = vpop.f32.mrb[0].mxu0
    %210 = vmatprep.mubr.f32.mxu0 0.0
    %211 = vmatmul.mubr.f32.gmra.mrb[0].mxu0 %v77
    %v212 = vpop.f32.mrb[0].mxu0
    %v213 = vadd.f32 %v40, %v212
    %v214 = vpop.f32.mrb[0].mxu0
    %215 = vmatprep.mubr.f32.mxu0 0.0
    %216 = vmatmul.mubr.f32.gmra.mrb[0].mxu0 %v80
    %v217 = vpop.f32.mrb[0].mxu0
    %v218 = vadd.f32 %v40, %v217
    %v219 = vpop.f32.mrb[0].mxu0
    %220 = vmatprep.mubr.f32.mxu0 0.0
    %221 = vmatmul.mubr.f32.gmra.mrb[0].mxu0 %v83
    %v222 = vpop.f32.mrb[0].mxu0
    %v223 = vadd.f32 %v40, %v222
    %v224 = vpop.f32.mrb[0].mxu0
    %225 = vmatprep.mubr.f32.mxu0 0.0
    %226 = vmatmul.mubr.f32.gmra.mrb[0].mxu0 %v86
    %v227 = vpop.f32.mrb[0].mxu0
    %v228 = vadd.f32 %v40, %v227
    %v229 = vpop.f32.mrb[0].mxu0
    %230 = vmatprep.mubr.f32.mxu0 0.0
    %231 = vmatmul.mubr.f32.gmra.mrb[0].mxu0 %v89
    %v232 = vpop.f32.mrb[0].mxu0
    %v233 = vadd.f32 %v40, %v232
    %v234 = vpop.f32.mrb[0].mxu0
    %235 = vdwg.mxu0
    %236 = vst [vmem:[#allocation2] sm:$0xff] %v158
    %237 = vst [vmem:[#allocation2 + $0x8] sm:$0xff] %v163
    %238 = vst [vmem:[#allocation2 + $0x10] sm:$0xff] %v168
    %239 = vst [vmem:[#allocation2 + $0x18] sm:$0xff] %v173
    %240 = vst [vmem:[#allocation2 + $0x20] sm:$0xff] %v178
    %241 = vst [vmem:[#allocation2 + $0x28] sm:$0xff] %v183
    %242 = vst [vmem:[#allocation2 + $0x30] sm:$0xff] %v188
    %243 = vst [vmem:[#allocation2 + $0x38] sm:$0xff] %v193
    %244 = vst [vmem:[#allocation2 + $0x40] sm:$0xff] %v198
    %245 = vst [vmem:[#allocation2 + $0x48] sm:$0xff] %v203
    %246 = vst [vmem:[#allocation2 + $0x50] sm:$0xff] %v208
    %247 = vst [vmem:[#allocation2 + $0x58] sm:$0xff] %v213
    %248 = vst [vmem:[#allocation2 + $0x60] sm:$0xff] %v218
    %249 = vst [vmem:[#allocation2 + $0x68] sm:$0xff] %v223
    %250 = vst [vmem:[#allocation2 + $0x70] sm:$0xff] %v228
    %251 = vst [vmem:[#allocation2 + $0x78] sm:$0xff] %v233
    // Predicated region
    $region14: #{tpu_custom_call.1} parent=1 // pred_check
      _
    $region15: #{tpu_custom_call.1} parent=1 // pred_check_branch
      %253 = sbr.rel (0) target = $region17
    $region16: #{tpu_custom_call.1} parent=1 // pred_region
      %s255 = ssub.s32 2048, 2048
      %256 = vsyncadd [#allocation3], %s255
      %s257 = sshll.u32 [#allocation2], 4
      %s258 = int_to_ptr.vmem [resolvable:$true] %s257
      %263 = dma.vmem_to_hbm [thread:$0]  %s258, 2048, %s3, [#allocation3], 128, 128, 8
    $region17: #{tpu_custom_call.1} parent=1 // pred_fallthru
      _
    // Predicated region
    $region18: #{tpu_custom_call.1} parent=1 // pred_check
      _
    $region19: #{tpu_custom_call.1} parent=1 // pred_check_branch
      %265 = sbr.rel (0) target = $region21
    $region20: #{tpu_custom_call.1} parent=1 // pred_region
      %266 = dma.done [#allocation3], 2048
    $region21: #{tpu_custom_call.1} parent=1 // pred_fallthru
      _
    %267 = vsyncpa [#allocation3], 1

</llo_original>
